<compile_context>
chip_gen: v6e
topology: v6e:2x2x1
jax: 0.10.0
libtpu: 0.0.40
codegen_flags: <defaults>
</compile_context>

<pallas_src>
import functools

import jax
import jax.numpy as jnp
from jax.experimental import pallas as pl
from jax.experimental.pallas import tpu as pltpu

# ----- stand-ins for the original `args` namespace -----
FEAT_SOFT_TOKEN_RATE = 0.1
SOFT_TOKEN_RATE = 0.1
MODEL_CAT_RATE = 0.55
GNN_LAYER = 2
# TODO(synk): nn.Dropout(p=args.drop_rate) implemented as identity (eval-mode / p=0).

EPS = 1e-12  # matches torch F.normalize default eps

# Tiling constants (legal on v5e/v6e/v7x: multiples of (16,128) bf16 tiles; block working
# sets stay well below the 16/32 MiB default scoped-VMEM limits).
_ROW_ALIGN = 512     # padding of the user / item axes (graph M and K dims)
_MM_TILE = 512       # row & reduction tile of the tiled graph matmuls
_EW_TILE = 256       # row tile for elementwise / feature-transform / A^T@B kernels
_LANE_ALIGN = 128    # lane padding of every feature / embedding axis


def _round_up(x, m):
    return ((x + m - 1) // m) * m


def _pad2(x, rp, cp, dtype=None):
    if dtype is not None:
        x = x.astype(dtype)
    r, c = x.shape
    if r == rp and c == cp:
        return x
    return jnp.pad(x, ((0, rp - r), (0, cp - c)))


def _row_normalize(x):
    # torch.nn.functional.normalize(x, p=2, dim=1)
    nrm = jnp.sqrt(jnp.sum(x * x, axis=-1, keepdims=True))
    return x / jnp.maximum(nrm, EPS)


# -------------------- Pallas kernels --------------------
def _matmul_kernel(a_ref, b_ref, o_ref, acc_ref):
    @pl.when(pl.program_id(1) == 0)
    def _():
        acc_ref[...] = jnp.zeros_like(acc_ref)

    acc_ref[...] += jnp.dot(a_ref[...], b_ref[...],
                            preferred_element_type=jnp.float32)

    @pl.when(pl.program_id(1) == pl.num_programs(1) - 1)
    def _():
        o_ref[...] = acc_ref[...]


def _matmul_softmax_kernel(a_ref, b_ref, o_ref, acc_ref, *, n_valid):
    @pl.when(pl.program_id(1) == 0)
    def _():
        acc_ref[...] = jnp.zeros_like(acc_ref)

    acc_ref[...] += jnp.dot(a_ref[...], b_ref[...],
                            preferred_element_type=jnp.float32)

    @pl.when(pl.program_id(1) == pl.num_programs(1) - 1)
    def _():
        s = acc_ref[...]
        # mask padded lanes so they do not contribute to the row-softmax
        col = jax.lax.broadcasted_iota(jnp.int32, s.shape, 1)
        s = jnp.where(col < n_valid, s, -jnp.inf)
        m = jnp.max(s, axis=-1, keepdims=True)
        e = jnp.exp(s - m)
        denom = jnp.sum(e, axis=-1, keepdims=True)
        o_ref[...] = e * pl.reciprocal(denom, approx=True)


def _atb_kernel(a_ref, b_ref, o_ref, acc_ref):
    # accumulate A^T @ B across row tiles (contraction over rows, no wrapper transpose)
    @pl.when(pl.program_id(0) == 0)
    def _():
        acc_ref[...] = jnp.zeros_like(acc_ref)

    acc_ref[...] += jax.lax.dot_general(
        a_ref[...], b_ref[...],
        dimension_numbers=(((0,), (0,)), ((), ())),
        preferred_element_type=jnp.float32)

    @pl.when(pl.program_id(0) == pl.num_programs(0) - 1)
    def _():
        o_ref[...] = acc_ref[...]


def _feat_trans_kernel(feat_ref, prompt_ref, small_ref, w_ref, b_ref, o_ref, *, rate):
    # p = prompt_item_tile @ (prompt_item.T @ feats)
    p = jnp.dot(prompt_ref[...], small_ref[...], preferred_element_type=jnp.float32)
    nrm = jnp.sqrt(jnp.sum(p * p, axis=-1, keepdims=True))
    x = feat_ref[...].astype(jnp.float32) + rate * (p / jnp.maximum(nrm, EPS))
    # nn.Linear: y = x @ W.T + b (contract over feature dim via dot_general)
    y = jax.lax.dot_general(
        x.astype(jnp.bfloat16), w_ref[...],
        dimension_numbers=(((1,), (1,)), ((), ())),
        preferred_element_type=jnp.float32)
    o_ref[...] = y + b_ref[...]


def _add_norm_kernel(base_ref, p_ref, o_ref, *, rate):
    p = p_ref[...]
    nrm = jnp.sqrt(jnp.sum(p * p, axis=-1, keepdims=True))
    o_ref[...] = base_ref[...] + rate * (p / jnp.maximum(nrm, EPS))


def _final_combine_kernel(sum_ref, a_ref, b_ref, o_ref, *, inv_layers, rate):
    a = a_ref[...]
    b = b_ref[...]
    na = jnp.sqrt(jnp.sum(a * a, axis=-1, keepdims=True))
    nb = jnp.sqrt(jnp.sum(b * b, axis=-1, keepdims=True))
    o_ref[...] = (sum_ref[...] * inv_layers
                  + rate * (a / jnp.maximum(na, EPS))
                  + rate * (b / jnp.maximum(nb, EPS)))


# -------------------- pallas_call wrappers --------------------
def pallas_graph_matmul(g_pad, rhs, m_true, softmax=False):
    """(pre-padded bf16 graph) @ rhs with fp32 accumulation; optional fused row-softmax."""
    Mp, Kp = g_pad.shape
    K_true, N_true = rhs.shape
    Np = _round_up(N_true, _LANE_ALIGN)
    rhs_p = _pad2(rhs, Kp, Np, jnp.bfloat16)
    tm = min(_MM_TILE, Mp)
    tk = min(_MM_TILE, Kp)
    if softmax:
        kernel = functools.partial(_matmul_softmax_kernel, n_valid=N_true)
    else:
        kernel = _matmul_kernel
    out = pl.pallas_call(
        kernel,
        out_shape=jax.ShapeDtypeStruct((Mp, Np), jnp.float32),
        grid=(Mp // tm, Kp // tk),
        in_specs=[pl.BlockSpec((tm, tk), lambda i, k: (i, k)),
                  pl.BlockSpec((tk, Np), lambda i, k: (k, 0))],
        out_specs=pl.BlockSpec((tm, Np), lambda i, k: (i, 0)),
        scratch_shapes=[pltpu.VMEM((tm, Np), jnp.float32)],
        compiler_params=pltpu.CompilerParams(
            dimension_semantics=("parallel", "arbitrary")),
    )(g_pad, rhs_p)
    return out[:m_true, :N_true]


def pallas_atb(a, b):
    """Compute a.T @ b (contraction over rows) with fp32 accumulation."""
    R, Ca = a.shape
    _, Cb = b.shape
    Rp = _round_up(R, _EW_TILE)
    Ca_p = _round_up(Ca, _LANE_ALIGN)
    Cb_p = _round_up(Cb, _LANE_ALIGN)
    tr = _EW_TILE
    a_p = _pad2(a, Rp, Ca_p, jnp.bfloat16)
    b_p = _pad2(b, Rp, Cb_p, jnp.bfloat16)
    out = pl.pallas_call(
        _atb_kernel,
        out_shape=jax.ShapeDtypeStruct((Ca_p, Cb_p), jnp.float32),
        grid=(Rp // tr,),
        in_specs=[pl.BlockSpec((tr, Ca_p), lambda k: (k, 0)),
                  pl.BlockSpec((tr, Cb_p), lambda k: (k, 0))],
        out_specs=pl.BlockSpec((Ca_p, Cb_p), lambda k: (0, 0)),
        scratch_shapes=[pltpu.VMEM((Ca_p, Cb_p), jnp.float32)],
        compiler_params=pltpu.CompilerParams(dimension_semantics=("arbitrary",)),
    )(a_p, b_p)
    return out[:Ca, :Cb]


def pallas_feat_trans(feats, prompt_item, small, w, bias, rate):
    """Fused: (feats + rate*normalize(prompt_item @ small)) @ W.T + b, row-tiled."""
    Ni, F = feats.shape
    E = prompt_item.shape[1]
    Eo = w.shape[0]
    Ni_p = _round_up(Ni, _EW_TILE)
    F_p = _round_up(F, _LANE_ALIGN)
    E_p = _round_up(E, _LANE_ALIGN)
    Eo_p = _round_up(Eo, _LANE_ALIGN)
    tm = _EW_TILE
    feats_p = _pad2(feats, Ni_p, F_p, jnp.bfloat16)
    prompt_p = _pad2(prompt_item, Ni_p, E_p, jnp.bfloat16)
    small_p = _pad2(small, E_p, F_p, jnp.bfloat16)
    w_p = _pad2(w, Eo_p, F_p, jnp.bfloat16)
    b_p = jnp.pad(bias, (0, Eo_p - Eo)).reshape(1, Eo_p).astype(jnp.float32)
    kernel = functools.partial(_feat_trans_kernel, rate=rate)
    out = pl.pallas_call(
        kernel,
        out_shape=jax.ShapeDtypeStruct((Ni_p, Eo_p), jnp.float32),
        grid=(Ni_p // tm,),
        in_specs=[pl.BlockSpec((tm, F_p), lambda i: (i, 0)),
                  pl.BlockSpec((tm, E_p), lambda i: (i, 0)),
                  pl.BlockSpec((E_p, F_p), lambda i: (0, 0)),
                  pl.BlockSpec((Eo_p, F_p), lambda i: (0, 0)),
                  pl.BlockSpec((1, Eo_p), lambda i: (0, 0))],
        out_specs=pl.BlockSpec((tm, Eo_p), lambda i: (i, 0)),
        compiler_params=pltpu.CompilerParams(dimension_semantics=("parallel",)),
    )(feats_p, prompt_p, small_p, w_p, b_p)
    return out[:Ni, :Eo]


def _rowwise_pallas(kernel, arrays):
    R, C = arrays[0].shape
    Rp = _round_up(R, _EW_TILE)
    Cp = _round_up(C, _LANE_ALIGN)
    tm = _EW_TILE
    padded = [_pad2(a, Rp, Cp, jnp.float32) for a in arrays]
    out = pl.pallas_call(
        kernel,
        out_shape=jax.ShapeDtypeStruct((Rp, Cp), jnp.float32),
        grid=(Rp // tm,),
        in_specs=[pl.BlockSpec((tm, Cp), lambda i: (i, 0)) for _ in padded],
        out_specs=pl.BlockSpec((tm, Cp), lambda i: (i, 0)),
        compiler_params=pltpu.CompilerParams(dimension_semantics=("parallel",)),
    )(*padded)
    return out[:R, :C]


def pallas_add_norm(base, p, rate):
    return _rowwise_pallas(functools.partial(_add_norm_kernel, rate=rate), [base, p])


def pallas_final_combine(s, a, b, inv_layers, rate):
    return _rowwise_pallas(
        functools.partial(_final_combine_kernel, inv_layers=inv_layers, rate=rate),
        [s, a, b])


# -------------------- Teacher_Model forward (Pallas-backed) --------------------
def teacher_forward(params, ui_graph, iu_graph, prompt_module=None):
    n_users, n_items = ui_graph.shape
    emb = params["user_emb"].shape[1]
    image_feats = params["image_feats"]
    text_feats = params["text_feats"]

    if prompt_module is None:
        prompt_user = jnp.zeros((n_users, emb), jnp.float32)
        prompt_item = jnp.zeros((n_items, emb), jnp.float32)
    else:
        prompt_user, prompt_item = prompt_module()

    # Pad + cast the dominant interaction graphs to bf16 once; reused by every graph matmul.
    ui_p = _pad2(ui_graph, _round_up(n_users, _ROW_ALIGN),
                 _round_up(n_items, _ROW_ALIGN), jnp.bfloat16)
    iu_p = _pad2(iu_graph, _round_up(n_items, _ROW_ALIGN),
                 _round_up(n_users, _ROW_ALIGN), jnp.bfloat16)

    # ---- prompt-feature path + modality Linear (fused per modality) ----
    small_img = pallas_atb(prompt_item, image_feats)   # [emb, img_dim]
    small_txt = pallas_atb(prompt_item, text_feats)    # [emb, txt_dim]
    image_feat = pallas_feat_trans(image_feats, prompt_item, small_img,
                                   params["image_w"], params["image_b"],
                                   FEAT_SOFT_TOKEN_RATE)
    text_feat = pallas_feat_trans(text_feats, prompt_item, small_txt,
                                  params["text_w"], params["text_b"],
                                  FEAT_SOFT_TOKEN_RATE)

    # ---- ID embeddings + soft tokens ----
    u_g = pallas_add_norm(params["user_emb"], prompt_user, SOFT_TOKEN_RATE)
    i_g = pallas_add_norm(params["item_emb"], prompt_item, SOFT_TOKEN_RATE)
    user_sum, item_sum = u_g, i_g

    # The torch modality-propagation loop recomputes identical results each iteration,
    # so it is computed exactly once, fused (lane-concat) with the first ID-GNN hop
    # where possible -> each graph is streamed from HBM once per hop instead of 3x.
    if GNN_LAYER >= 2:
        rhs_u = jnp.concatenate([image_feat, text_feat, i_g], axis=1)
        out_u = pallas_graph_matmul(ui_p, rhs_u, n_users)    # [img_user | txt_user | u_g1]
        out_i = pallas_graph_matmul(iu_p, out_u, n_items)    # [img_item | txt_item | i_g1]
        image_user_feats = out_u[:, :emb]
        text_user_feats = out_u[:, emb:2 * emb]
        u_g = out_u[:, 2 * emb:]
        image_item_feats = out_i[:, :emb]
        text_item_feats = out_i[:, emb:2 * emb]
        i_g = out_i[:, 2 * emb:]
        user_sum = user_sum + u_g
        item_sum = item_sum + i_g
        remaining_plain = GNN_LAYER - 2
    else:
        rhs_u = jnp.concatenate([image_feat, text_feat], axis=1)
        out_u = pallas_graph_matmul(ui_p, rhs_u, n_users)
        out_i = pallas_graph_matmul(iu_p, out_u, n_items)
        image_user_feats = out_u[:, :emb]
        text_user_feats = out_u[:, emb:]
        image_item_feats = out_i[:, :emb]
        text_item_feats = out_i[:, emb:]
        remaining_plain = 0

    for _ in range(remaining_plain):
        u_g = pallas_graph_matmul(ui_p, i_g, n_users)
        user_sum = user_sum + u_g
        i_g = pallas_graph_matmul(iu_p, u_g, n_items)
        item_sum = item_sum + i_g

    # last ID-GNN hop: matmul fused with row-softmax
    u_g = pallas_graph_matmul(ui_p, i_g, n_users, softmax=True)
    user_sum = user_sum + u_g
    i_g = pallas_graph_matmul(iu_p, u_g, n_items, softmax=True)
    item_sum = item_sum + i_g

    inv = 1.0 / float(GNN_LAYER + 1)
    u_out = pallas_final_combine(user_sum, image_user_feats, text_user_feats,
                                 inv, MODEL_CAT_RATE)
    i_out = pallas_final_combine(item_sum, image_item_feats, text_item_feats,
                                 inv, MODEL_CAT_RATE)

    return (u_out, i_out, image_item_feats, text_item_feats,
            image_user_feats, text_user_feats, u_out, i_out,
            prompt_user, prompt_item)


# -------------------- pure-JAX reference for validation --------------------
def teacher_forward_ref(params, ui_graph, iu_graph):
    n_users, n_items = ui_graph.shape
    emb = params["user_emb"].shape[1]
    image_feats, text_feats = params["image_feats"], params["text_feats"]
    prompt_user = jnp.zeros((n_users, emb), jnp.float32)
    prompt_item = jnp.zeros((n_items, emb), jnp.float32)

    fpi_img = prompt_item @ (prompt_item.T @ image_feats)
    fpi_txt = prompt_item @ (prompt_item.T @ text_feats)
    image_feat = (image_feats + FEAT_SOFT_TOKEN_RATE * _row_normalize(fpi_img)) @ params["image_w"].T + params["image_b"]
    text_feat = (text_feats + FEAT_SOFT_TOKEN_RATE * _row_normalize(fpi_txt)) @ params["text_w"].T + params["text_b"]

    for _ in range(GNN_LAYER):
        image_user = ui_graph @ image_feat
        image_item = iu_graph @ image_user
        text_user = ui_graph @ text_feat
        text_item = iu_graph @ text_user

    u_g = params["user_emb"] + SOFT_TOKEN_RATE * _row_normalize(prompt_user)
    i_g = params["item_emb"] + SOFT_TOKEN_RATE * _row_normalize(prompt_item)
    ulist, ilist = [u_g], [i_g]
    for i in range(GNN_LAYER):
        if i == GNN_LAYER - 1:
            u_g = jax.nn.softmax(ui_graph @ i_g, axis=-1)
            i_g = jax.nn.softmax(iu_graph @ u_g, axis=-1)
        else:
            u_g = ui_graph @ i_g
            i_g = iu_graph @ u_g
        ulist.append(u_g)
        ilist.append(i_g)
    user_embeddings = jnp.mean(jnp.stack(ulist, 0), axis=0)
    item_embeddings = jnp.mean(jnp.stack(ilist, 0), axis=0)
    u_out = user_embeddings + MODEL_CAT_RATE * _row_normalize(image_user) + MODEL_CAT_RATE * _row_normalize(text_user)
    i_out = item_embeddings + MODEL_CAT_RATE * _row_normalize(image_item) + MODEL_CAT_RATE * _row_normalize(text_item)
    return u_out, i_out


# -------------------- deterministic parameter init --------------------
def init_params(key, n_users, n_items, emb, img_dim, txt_dim):
    ks = jax.random.split(key, 8)

    def xavier_normal(k, shape):
        std = (2.0 / (shape[0] + shape[1])) ** 0.5
        return std * jax.random.normal(k, shape, jnp.float32)

    def xavier_uniform(k, shape):
        bound = (6.0 / (shape[0] + shape[1])) ** 0.5
        return jax.random.uniform(k, shape, jnp.float32, -bound, bound)

    def linear_bias(k, out_dim, in_dim):
        bound = 1.0 / (in_dim ** 0.5)
        return jax.random.uniform(k, (out_dim,), jnp.float32, -bound, bound)

    return {
        "user_emb": xavier_normal(ks[0], (n_users, emb)),
        "item_emb": xavier_normal(ks[1], (n_items, emb)),
        "image_feats": jax.random.normal(ks[2], (n_items, img_dim), jnp.float32),
        "text_feats": jax.random.normal(ks[3], (n_items, txt_dim), jnp.float32),
        "image_w": xavier_uniform(ks[4], (emb, img_dim)),   # (out, in) like nn.Linear
        "image_b": linear_bias(ks[5], emb, img_dim),
        "text_w": xavier_uniform(ks[6], (emb, txt_dim)),
        "text_b": linear_bias(ks[7], emb, txt_dim),
    }


if __name__ == "__main__":
    n_users, n_items = 16, 24
    emb, img_dim, txt_dim = 32, 64, 48

    key = jax.random.PRNGKey(0)
    kp, kg1, kg2 = jax.random.split(key, 3)
    params = init_params(kp, n_users, n_items, emb, img_dim, txt_dim)

    # dense (args.sparse=False) row-stochastic interaction graphs
    ui_graph = jax.random.uniform(kg1, (n_users, n_items), jnp.float32)
    ui_graph = ui_graph / jnp.sum(ui_graph, axis=1, keepdims=True)
    iu_graph = jax.random.uniform(kg2, (n_items, n_users), jnp.float32)
    iu_graph = iu_graph / jnp.sum(iu_graph, axis=1, keepdims=True)

    outs = teacher_forward(params, ui_graph, iu_graph)
    outs = jax.block_until_ready(outs)

    # sanity-check against pure-JAX fp32 reference (kernels use bf16 inputs / fp32 accum)
    u_ref, i_ref = teacher_forward_ref(params, ui_graph, iu_graph)
    assert outs[0].shape == (n_users, emb) and outs[1].shape == (n_items, emb)
    assert all(bool(jnp.all(jnp.isfinite(o))) for o in outs)
    assert bool(jnp.allclose(outs[0], u_ref, rtol=5e-2, atol=5e-2)), \
        float(jnp.max(jnp.abs(outs[0] - u_ref)))
    assert bool(jnp.allclose(outs[1], i_ref, rtol=5e-2, atol=5e-2)), \
        float(jnp.max(jnp.abs(outs[1] - i_ref)))

    print("KERNEL_OK")
</pallas_src>

<mosaic_0001>
module attributes {stable_mosaic.version = 11 : i64} {
  func.func @_atb_kernel(%arg0: i32, %arg1: memref<256x128xbf16, #tpu.memory_space<vmem>>, %arg2: memref<256x128xbf16, #tpu.memory_space<vmem>>, %arg3: memref<128x128xf32, #tpu.memory_space<vmem>>, %arg4: memref<128x128xf32, #tpu.memory_space<vmem>>) attributes {dimension_semantics = [#tpu.dimension_semantics<arbitrary>], iteration_bounds = array<i64: 1>, scalar_prefetch = 0 : i64, scratch_operands = 1 : i64, tpu.core_type = #tpu.core_type<tc>, window_params = [{transform_indices = @transform_0, window_bounds = array<i64: 256, 128>}, {transform_indices = @transform_1, window_bounds = array<i64: 256, 128>}, {pipeline_mode = #tpu.pipeline_mode<synchronous>, transform_indices = @transform_2, window_bounds = array<i64: 128, 128>}]} {
    %c0_i32 = arith.constant 0 : i32
    %0 = arith.cmpi eq, %arg0, %c0_i32 : i32
    %1 = arith.extui %0 : i1 to i32
    %c0_i32_0 = arith.constant 0 : i32
    %2 = arith.cmpi ne, %1, %c0_i32_0 : i32
    scf.if %2 {
      %cst_10 = arith.constant 0.000000e+00 : f32
      %12 = vector.broadcast %cst_10 : f32 to vector<128x128xf32>
      %c0_11 = arith.constant 0 : index
      %c0_12 = arith.constant 0 : index
      %13 = vector.load %arg4[%c0_11, %c0_12] : memref<128x128xf32, #tpu.memory_space<vmem>>, vector<128x128xf32>
      tpu.vector_store %arg4[%c0_11, %c0_12], %12 {strides = array<i32>} : memref<128x128xf32, #tpu.memory_space<vmem>>, vector<128x128xf32>,
    } else {
    }
    %c0 = arith.constant 0 : index
    %c0_1 = arith.constant 0 : index
    %3 = vector.load %arg4[%c0, %c0_1] : memref<128x128xf32, #tpu.memory_space<vmem>>, vector<128x128xf32>
    %c0_2 = arith.constant 0 : index
    %c0_3 = arith.constant 0 : index
    %4 = vector.load %arg1[%c0_2, %c0_3] : memref<256x128xbf16, #tpu.memory_space<vmem>>, vector<256x128xbf16>
    %c0_4 = arith.constant 0 : index
    %c0_5 = arith.constant 0 : index
    %5 = vector.load %arg2[%c0_4, %c0_5] : memref<256x128xbf16, #tpu.memory_space<vmem>>, vector<256x128xbf16>
    %cst = arith.constant dense<0.000000e+00> : vector<128x128xf32>
    %6 = tpu.matmul %4, %5, %cst {dimension_numbers = #tpu.dot_dimension_numbers<[0], [0], [1], [1], [0, 1, 1, 1], [], []>} : vector<256x128xbf16>, vector<256x128xbf16>, vector<128x128xf32> -> vector<128x128xf32>
    %7 = arith.addf %3, %6 : vector<128x128xf32>
    %c0_6 = arith.constant 0 : index
    %c0_7 = arith.constant 0 : index
    %8 = vector.load %arg4[%c0_6, %c0_7] : memref<128x128xf32, #tpu.memory_space<vmem>>, vector<128x128xf32>
    tpu.vector_store %arg4[%c0_6, %c0_7], %7 {strides = array<i32>} : memref<128x128xf32, #tpu.memory_space<vmem>>, vector<128x128xf32>,
    %c0_i32_8 = arith.constant 0 : i32
    %9 = arith.cmpi eq, %arg0, %c0_i32_8 : i32
    %10 = arith.extui %9 : i1 to i32
    %c0_i32_9 = arith.constant 0 : i32
    %11 = arith.cmpi ne, %10, %c0_i32_9 : i32
    scf.if %11 {
      %c0_10 = arith.constant 0 : index
      %c0_11 = arith.constant 0 : index
      %12 = vector.load %arg4[%c0_10, %c0_11] : memref<128x128xf32, #tpu.memory_space<vmem>>, vector<128x128xf32>
      %c0_12 = arith.constant 0 : index
      %c0_13 = arith.constant 0 : index
      %13 = vector.load %arg3[%c0_12, %c0_13] : memref<128x128xf32, #tpu.memory_space<vmem>>, vector<128x128xf32>
      tpu.vector_store %arg3[%c0_12, %c0_13], %12 {strides = array<i32>} : memref<128x128xf32, #tpu.memory_space<vmem>>, vector<128x128xf32>,
    } else {
    }
    return
  }
  func.func @transform_0(%arg0: i32) -> (i32, i32) {
    %c0_i32 = arith.constant 0 : i32
    %c0_i32_0 = arith.constant 0 : i32
    return %arg0, %c0_i32 : i32, i32
  }
  func.func @transform_1(%arg0: i32) -> (i32, i32) {
    %c0_i32 = arith.constant 0 : i32
    %c0_i32_0 = arith.constant 0 : i32
    return %arg0, %c0_i32 : i32, i32
  }
  func.func @transform_2(%arg0: i32) -> (i32, i32) {
    %c0_i32 = arith.constant 0 : i32
    %c0_i32_0 = arith.constant 0 : i32
    %c0_i32_1 = arith.constant 0 : i32
    return %c0_i32, %c0_i32_0 : i32, i32
  }
}

</mosaic_0001>

<llo_original>
// kernel: tpu_custom_call.1
$region0: #{tpu_custom_call.1}
  #allocation0 [shape = 'u32[]', space=smem, size = 0x4, offset = 0x4, fixed_abs, tag = 'smem constant byte address 0x4 - core index']
  #allocation1 [shape = 'u32[144,128]{1,0:T(1,128)}', space=vmem, size = 0x12000, scoped, tag = 'internal scratch']
  #allocation2 [shape = 'f32[128,128]{1,0:T(8,128)}', space=vmem, size = 0x10000, scoped, tag = 'scratch operand']
  %s0 = inlined_call_operand.hbm [shape: bf16[256,128], index: 0, kind: input, shape index: {}]
  %s1 = inlined_call_operand.hbm [shape: bf16[256,128], index: 1, kind: input, shape index: {}]
  %s2 = inlined_call_operand.hbm [shape: f32[128,128], index: 2, kind: output, shape index: {}]
  %s3 = sld [smem:[#allocation0]]
  $region34: #{tpu_custom_call.1} parent=0
    _
  %s5 = ssub.s32 1, %s3
  %s6 = scalar_select 0, %s5, %s3
  $region1: #{tpu_custom_call.1} parent=0
    #allocation3 [shape = 'u8[65536]{0}', space=vmem, size = 0x10000, scoped, tag = 'input window, operand 0, single buffered']
    #allocation4 [shape = 's32[1]{0}', space=sflag, size = 0x4, scoped, tag = 'scoped memory for tpu_custom_call.1']
    #allocation5 [shape = 's32[1]{0}', space=sflag, size = 0x4, scoped, tag = 'scoped memory for tpu_custom_call.1']
    #allocation6 [shape = 'u8[65536]{0}', space=vmem, size = 0x10000, scoped, tag = 'input window, operand 1, single buffered']
    #allocation7 [shape = 's32[1]{0}', space=sflag, size = 0x4, scoped, tag = 'scoped memory for tpu_custom_call.1']
    #allocation8 [shape = 'u8[65536]{0}', space=vmem, size = 0x10000, scoped, tag = 'output window, operand 0, single buffered']
    %7 = vsyncpa [#allocation4], 0
    %8 = vsyncpa [#allocation7], 0
    %9 = vsyncpa [#allocation5], 0
    // Predicated region
    $region2: #{tpu_custom_call.1} parent=1 // pred_check
      _
    $region3: #{tpu_custom_call.1} parent=1 // pred_check_branch
      %11 = sbr.rel (0) target = $region5
    $region4: #{tpu_custom_call.1} parent=1 // pred_region
      %s13 = ssub.s32 2048, 2048
      %14 = vsyncadd [#allocation4], %s13
      %s15 = sshll.u32 [#allocation3], 4
      %s16 = int_to_ptr.vmem [resolvable:$true] %s15
      %21 = dma.hbm_to_vmem [thread:$0]  %s0, 2048, %s16, [#allocation4], 64, 64, 4
    $region5: #{tpu_custom_call.1} parent=1 // pred_fallthru
      _
    // Predicated region
    $region6: #{tpu_custom_call.1} parent=1 // pred_check
      _
    $region7: #{tpu_custom_call.1} parent=1 // pred_check_branch
      %23 = sbr.rel (0) target = $region9
    $region8: #{tpu_custom_call.1} parent=1 // pred_region
      %s25 = ssub.s32 2048, 2048
      %26 = vsyncadd [#allocation7], %s25
      %s27 = sshll.u32 [#allocation6], 4
      %s28 = int_to_ptr.vmem [resolvable:$true] %s27
      %33 = dma.hbm_to_vmem [thread:$0]  %s1, 2048, %s28, [#allocation7], 64, 64, 4
    $region9: #{tpu_custom_call.1} parent=1 // pred_fallthru
      _
    // Predicated region
    $region10: #{tpu_custom_call.1} parent=1 // pred_check
      _
    $region11: #{tpu_custom_call.1} parent=1 // pred_check_branch
      %35 = sbr.rel (0) target = $region13
    $region12: #{tpu_custom_call.1} parent=1 // pred_region
      %36 = dma.done [#allocation4], 2048
    $region13: #{tpu_custom_call.1} parent=1 // pred_fallthru
      _
    // Predicated region
    $region14: #{tpu_custom_call.1} parent=1 // pred_check
      _
    $region15: #{tpu_custom_call.1} parent=1 // pred_check_branch
      %38 = sbr.rel (0) target = $region17
    $region16: #{tpu_custom_call.1} parent=1 // pred_region
      %39 = dma.done [#allocation7], 2048
    $region17: #{tpu_custom_call.1} parent=1 // pred_fallthru
      _
    %p41 = scmp.eq.s32.totalorder 0, 0
    // Predicated region
    $region18: #{tpu_custom_call.1} parent=1 // pred_check
      %p42 = pneg %p41
    $region19: #{tpu_custom_call.1} parent=1 // pred_check_branch
      %44 = sbr.rel (%p42) target = $region21
    $region20: #{tpu_custom_call.1} parent=1 // pred_region
      %45 = vst [vmem:[#allocation2] sm:$0xff] 0.0
      %46 = vst [vmem:[#allocation2 + $0x8] sm:$0xff] 0.0
      %47 = vst [vmem:[#allocation2 + $0x10] sm:$0xff] 0.0
      %48 = vst [vmem:[#allocation2 + $0x18] sm:$0xff] 0.0
      %49 = vst [vmem:[#allocation2 + $0x20] sm:$0xff] 0.0
      %50 = vst [vmem:[#allocation2 + $0x28] sm:$0xff] 0.0
      %51 = vst [vmem:[#allocation2 + $0x30] sm:$0xff] 0.0
      %52 = vst [vmem:[#allocation2 + $0x38] sm:$0xff] 0.0
      %53 = vst [vmem:[#allocation2 + $0x40] sm:$0xff] 0.0
      %54 = vst [vmem:[#allocation2 + $0x48] sm:$0xff] 0.0
      %55 = vst [vmem:[#allocation2 + $0x50] sm:$0xff] 0.0
      %56 = vst [vmem:[#allocation2 + $0x58] sm:$0xff] 0.0
      %57 = vst [vmem:[#allocation2 + $0x60] sm:$0xff] 0.0
      %58 = vst [vmem:[#allocation2 + $0x68] sm:$0xff] 0.0
      %59 = vst [vmem:[#allocation2 + $0x70] sm:$0xff] 0.0
      %60 = vst [vmem:[#allocation2 + $0x78] sm:$0xff] 0.0
    $region21: #{tpu_custom_call.1} parent=1 // pred_fallthru
      _
    %v61 = vld [vmem:[#allocation2] sm:$0xff]
    %v62 = vld [vmem:[#allocation2 + $0x8] sm:$0xff]
    %v63 = vld [vmem:[#allocation2 + $0x10] sm:$0xff]
    %v64 = vld [vmem:[#allocation2 + $0x18] sm:$0xff]
    %v65 = vld [vmem:[#allocation2 + $0x20] sm:$0xff]
    %v66 = vld [vmem:[#allocation2 + $0x28] sm:$0xff]
    %v67 = vld [vmem:[#allocation2 + $0x30] sm:$0xff]
    %v68 = vld [vmem:[#allocation2 + $0x38] sm:$0xff]
    %v69 = vld [vmem:[#allocation2 + $0x40] sm:$0xff]
    %v70 = vld [vmem:[#allocation2 + $0x48] sm:$0xff]
    %v71 = vld [vmem:[#allocation2 + $0x50] sm:$0xff]
    %v72 = vld [vmem:[#allocation2 + $0x58] sm:$0xff]
    %v73 = vld [vmem:[#allocation2 + $0x60] sm:$0xff]
    %v74 = vld [vmem:[#allocation2 + $0x68] sm:$0xff]
    %v75 = vld [vmem:[#allocation2 + $0x70] sm:$0xff]
    %v76 = vld [vmem:[#allocation2 + $0x78] sm:$0xff]
    %v77 = vld [vmem:[#allocation3] sm:$0xf]
    %v78 = vld [vmem:[#allocation3 + $0x4] sm:$0xf]
    %v79 = vld [vmem:[#allocation3 + $0x8] sm:$0xf]
    %v80 = vld [vmem:[#allocation3 + $0xc] sm:$0xf]
    %v81 = vld [vmem:[#allocation3 + $0x10] sm:$0xf]
    %v82 = vld [vmem:[#allocation3 + $0x14] sm:$0xf]
    %v83 = vld [vmem:[#allocation3 + $0x18] sm:$0xf]
    %v84 = vld [vmem:[#allocation3 + $0x1c] sm:$0xf]
    %v85 = vld [vmem:[#allocation3 + $0x20] sm:$0xf]
    %v86 = vld [vmem:[#allocation3 + $0x24] sm:$0xf]
    %v87 = vld [vmem:[#allocation3 + $0x28] sm:$0xf]
    %v88 = vld [vmem:[#allocation3 + $0x2c] sm:$0xf]
    %v89 = vld [vmem:[#allocation3 + $0x30] sm:$0xf]
    %v90 = vld [vmem:[#allocation3 + $0x34] sm:$0xf]
    %v91 = vld [vmem:[#allocation3 + $0x38] sm:$0xf]
    %v92 = vld [vmem:[#allocation3 + $0x3c] sm:$0xf]
    %v93 = vld [vmem:[#allocation3 + $0x40] sm:$0xf]
    %v94 = vld [vmem:[#allocation3 + $0x44] sm:$0xf]
    %v95 = vld [vmem:[#allocation3 + $0x48] sm:$0xf]
    %v96 = vld [vmem:[#allocation3 + $0x4c] sm:$0xf]
    %v97 = vld [vmem:[#allocation3 + $0x50] sm:$0xf]
    %v98 = vld [vmem:[#allocation3 + $0x54] sm:$0xf]
    %v99 = vld [vmem:[#allocation3 + $0x58] sm:$0xf]
    %v100 = vld [vmem:[#allocation3 + $0x5c] sm:$0xf]
    %v101 = vld [vmem:[#allocation3 + $0x60] sm:$0xf]
    %v102 = vld [vmem:[#allocation3 + $0x64] sm:$0xf]
    %v103 = vld [vmem:[#allocation3 + $0x68] sm:$0xf]
    %v104 = vld [vmem:[#allocation3 + $0x6c] sm:$0xf]
    %v105 = vld [vmem:[#allocation3 + $0x70] sm:$0xf]
    %v106 = vld [vmem:[#allocation3 + $0x74] sm:$0xf]
    %v107 = vld [vmem:[#allocation3 + $0x78] sm:$0xf]
    %v108 = vld [vmem:[#allocation3 + $0x7c] sm:$0xf]
    %v109 = vld [vmem:[#allocation6] sm:$0xf]
    %v110 = vld [vmem:[#allocation6 + $0x4] sm:$0xf]
    %v111 = vld [vmem:[#allocation6 + $0x8] sm:$0xf]
    %v112 = vld [vmem:[#allocation6 + $0xc] sm:$0xf]
    %v113 = vld [vmem:[#allocation6 + $0x10] sm:$0xf]
    %v114 = vld [vmem:[#allocation6 + $0x14] sm:$0xf]
    %v115 = vld [vmem:[#allocation6 + $0x18] sm:$0xf]
    %v116 = vld [vmem:[#allocation6 + $0x1c] sm:$0xf]
    %v117 = vld [vmem:[#allocation6 + $0x20] sm:$0xf]
    %v118 = vld [vmem:[#allocation6 + $0x24] sm:$0xf]
    %v119 = vld [vmem:[#allocation6 + $0x28] sm:$0xf]
    %v120 = vld [vmem:[#allocation6 + $0x2c] sm:$0xf]
    %v121 = vld [vmem:[#allocation6 + $0x30] sm:$0xf]
    %v122 = vld [vmem:[#allocation6 + $0x34] sm:$0xf]
    %v123 = vld [vmem:[#allocation6 + $0x38] sm:$0xf]
    %v124 = vld [vmem:[#allocation6 + $0x3c] sm:$0xf]
    %v125 = vld [vmem:[#allocation6 + $0x40] sm:$0xf]
    %v126 = vld [vmem:[#allocation6 + $0x44] sm:$0xf]
    %v127 = vld [vmem:[#allocation6 + $0x48] sm:$0xf]
    %v128 = vld [vmem:[#allocation6 + $0x4c] sm:$0xf]
    %v129 = vld [vmem:[#allocation6 + $0x50] sm:$0xf]
    %v130 = vld [vmem:[#allocation6 + $0x54] sm:$0xf]
    %v131 = vld [vmem:[#allocation6 + $0x58] sm:$0xf]
    %v132 = vld [vmem:[#allocation6 + $0x5c] sm:$0xf]
    %v133 = vld [vmem:[#allocation6 + $0x60] sm:$0xf]
    %v134 = vld [vmem:[#allocation6 + $0x64] sm:$0xf]
    %v135 = vld [vmem:[#allocation6 + $0x68] sm:$0xf]
    %v136 = vld [vmem:[#allocation6 + $0x6c] sm:$0xf]
    %v137 = vld [vmem:[#allocation6 + $0x70] sm:$0xf]
    %v138 = vld [vmem:[#allocation6 + $0x74] sm:$0xf]
    %v139 = vld [vmem:[#allocation6 + $0x78] sm:$0xf]
    %v140 = vld [vmem:[#allocation6 + $0x7c] sm:$0xf]
    %v173 = vunpack.c.l.b16 %v77
    %v174 = vunpack.c.l.b16 %v78
    %v175 = vunpack.c.l.b16 %v79
    %v176 = vunpack.c.l.b16 %v80
    %v177 = vunpack.c.l.b16 %v81
    %v178 = vunpack.c.l.b16 %v82
    %v179 = vunpack.c.l.b16 %v83
    %v180 = vunpack.c.l.b16 %v84
    %v181 = vunpack.c.l.b16 %v85
    %v182 = vunpack.c.l.b16 %v86
    %v183 = vunpack.c.l.b16 %v87
    %v184 = vunpack.c.l.b16 %v88
    %v185 = vunpack.c.l.b16 %v89
    %v186 = vunpack.c.l.b16 %v90
    %v187 = vunpack.c.l.b16 %v91
    %v188 = vunpack.c.l.b16 %v92
    %v189 = vunpack.c.l.b16 %v93
    %v190 = vunpack.c.l.b16 %v94
    %v191 = vunpack.c.l.b16 %v95
    %v192 = vunpack.c.l.b16 %v96
    %v193 = vunpack.c.l.b16 %v97
    %v194 = vunpack.c.l.b16 %v98
    %v195 = vunpack.c.l.b16 %v99
    %v196 = vunpack.c.l.b16 %v100
    %v197 = vunpack.c.l.b16 %v101
    %v198 = vunpack.c.l.b16 %v102
    %v199 = vunpack.c.l.b16 %v103
    %v200 = vunpack.c.l.b16 %v104
    %v201 = vunpack.c.l.b16 %v105
    %v202 = vunpack.c.l.b16 %v106
    %v203 = vunpack.c.l.b16 %v107
    %v204 = vunpack.c.l.b16 %v108
    %v205 = vpack.c.b16 %v174, %v173
    %v206 = vpack.c.b16 %v176, %v175
    %v207 = vpack.c.b16 %v178, %v177
    %v208 = vpack.c.b16 %v180, %v179
    %v209 = vpack.c.b16 %v182, %v181
    %v210 = vpack.c.b16 %v184, %v183
    %v211 = vpack.c.b16 %v186, %v185
    %v212 = vpack.c.b16 %v188, %v187
    %v213 = vpack.c.b16 %v190, %v189
    %v214 = vpack.c.b16 %v192, %v191
    %v215 = vpack.c.b16 %v194, %v193
    %v216 = vpack.c.b16 %v196, %v195
    %v217 = vpack.c.b16 %v198, %v197
    %v218 = vpack.c.b16 %v200, %v199
    %v219 = vpack.c.b16 %v202, %v201
    %v220 = vpack.c.b16 %v204, %v203
    %237 = vxpose.xlu0.c.b16.start [1/8] %v205, 128
    %238 = vxpose.xlu0.c.b16.cont [2/8] %v206, 128
    %239 = vxpose.xlu0.c.b16.cont [3/8] %v207, 128
    %240 = vxpose.xlu0.c.b16.cont [4/8] %v208, 128
    %241 = vxpose.xlu0.c.b16.cont [5/8] %v209, 128
    %242 = vxpose.xlu0.c.b16.cont [6/8] %v210, 128
    %243 = vxpose.xlu0.c.b16.cont [7/8] %v211, 128
    %244 = vxpose.xlu0.c.b16.end [8/8] %v212, 128
    %v245 = vpop.trf.xlu0
    %v246 = vpop.trf.xlu0
    %v247 = vpop.trf.xlu0
    %v248 = vpop.trf.xlu0
    %v249 = vpop.trf.xlu0
    %v250 = vpop.trf.xlu0
    %v251 = vpop.trf.xlu0
    %v252 = vpop.trf.xlu0
    %253 = vxpose.xlu0.c.b16.start [1/8] %v213, 128
    %254 = vxpose.xlu0.c.b16.cont [2/8] %v214, 128
    %255 = vxpose.xlu0.c.b16.cont [3/8] %v215, 128
    %256 = vxpose.xlu0.c.b16.cont [4/8] %v216, 128
    %257 = vxpose.xlu0.c.b16.cont [5/8] %v217, 128
    %258 = vxpose.xlu0.c.b16.cont [6/8] %v218, 128
    %259 = vxpose.xlu0.c.b16.cont [7/8] %v219, 128
    %260 = vxpose.xlu0.c.b16.end [8/8] %v220, 128
    %v261 = vpop.trf.xlu0
    %v262 = vpop.trf.xlu0
    %v263 = vpop.trf.xlu0
    %v264 = vpop.trf.xlu0
    %v265 = vpop.trf.xlu0
    %v266 = vpop.trf.xlu0
    %v267 = vpop.trf.xlu0
    %v268 = vpop.trf.xlu0
    %v301 = vunpack.c.l.b16 %v109
    %v302 = vunpack.c.l.b16 %v110
    %v303 = vunpack.c.l.b16 %v111
    %v304 = vunpack.c.l.b16 %v112
    %v305 = vunpack.c.l.b16 %v113
    %v306 = vunpack.c.l.b16 %v114
    %v307 = vunpack.c.l.b16 %v115
    %v308 = vunpack.c.l.b16 %v116
    %v309 = vunpack.c.l.b16 %v117
    %v310 = vunpack.c.l.b16 %v118
    %v311 = vunpack.c.l.b16 %v119
    %v312 = vunpack.c.l.b16 %v120
    %v313 = vunpack.c.l.b16 %v121
    %v314 = vunpack.c.l.b16 %v122
    %v315 = vunpack.c.l.b16 %v123
    %v316 = vunpack.c.l.b16 %v124
    %v317 = vunpack.c.l.b16 %v125
    %v318 = vunpack.c.l.b16 %v126
    %v319 = vunpack.c.l.b16 %v127
    %v320 = vunpack.c.l.b16 %v128
    %v321 = vunpack.c.l.b16 %v129
    %v322 = vunpack.c.l.b16 %v130
    %v323 = vunpack.c.l.b16 %v131
    %v324 = vunpack.c.l.b16 %v132
    %v325 = vunpack.c.l.b16 %v133
    %v326 = vunpack.c.l.b16 %v134
    %v327 = vunpack.c.l.b16 %v135
    %v328 = vunpack.c.l.b16 %v136
    %v329 = vunpack.c.l.b16 %v137
    %v330 = vunpack.c.l.b16 %v138
    %v331 = vunpack.c.l.b16 %v139
    %v332 = vunpack.c.l.b16 %v140
    %v333 = vpack.c.b16 %v302, %v301
    %v334 = vpack.c.b16 %v304, %v303
    %v335 = vpack.c.b16 %v306, %v305
    %v336 = vpack.c.b16 %v308, %v307
    %v337 = vpack.c.b16 %v310, %v309
    %v338 = vpack.c.b16 %v312, %v311
    %v339 = vpack.c.b16 %v314, %v313
    %v340 = vpack.c.b16 %v316, %v315
    %v341 = vpack.c.b16 %v318, %v317
    %v342 = vpack.c.b16 %v320, %v319
    %v343 = vpack.c.b16 %v322, %v321
    %v344 = vpack.c.b16 %v324, %v323
    %v345 = vpack.c.b16 %v326, %v325
    %v346 = vpack.c.b16 %v328, %v327
    %v347 = vpack.c.b16 %v330, %v329
    %v348 = vpack.c.b16 %v332, %v331
    %365 = vmatprep.subr.bf16.mxu0 0
    %366 = vmatpush1.bf16.msra.mxu0 %v340
    %367 = vmatprep.subr.bf16.mxu0 0
    %368 = vmatpush1.bf16.msra.mxu0 %v339
    %369 = vmatprep.subr.bf16.mxu0 0
    %370 = vmatpush1.bf16.msra.mxu0 %v338
    %371 = vmatprep.subr.bf16.mxu0 0
    %372 = vmatpush1.bf16.msra.mxu0 %v337
    %373 = vmatprep.subr.bf16.mxu0 0
    %374 = vmatpush1.bf16.msra.mxu0 %v336
    %375 = vmatprep.subr.bf16.mxu0 0
    %376 = vmatpush1.bf16.msra.mxu0 %v335
    %377 = vmatprep.subr.bf16.mxu0 0
    %378 = vmatpush1.bf16.msra.mxu0 %v334
    %379 = vmatprep.subr.bf16.mxu0 0
    %380 = vmatpush1.bf16.msra.mxu0 %v333
    %381 = vmatprep.subr.bf16.mxu0 0
    %382 = vmatpush2.bf16.msra.mxu0 %v348
    %383 = vmatprep.subr.bf16.mxu0 0
    %384 = vmatpush2.bf16.msra.mxu0 %v347
    %385 = vmatprep.subr.bf16.mxu0 0
    %386 = vmatpush2.bf16.msra.mxu0 %v346
    %387 = vmatprep.subr.bf16.mxu0 0
    %388 = vmatpush2.bf16.msra.mxu0 %v345
    %389 = vmatprep.subr.bf16.mxu0 0
    %390 = vmatpush2.bf16.msra.mxu0 %v344
    %391 = vmatprep.subr.bf16.mxu0 0
    %392 = vmatpush2.bf16.msra.mxu0 %v343
    %393 = vmatprep.subr.bf16.mxu0 0
    %394 = vmatpush2.bf16.msra.mxu0 %v342
    %395 = vmatprep.subr.bf16.mxu0 0
    %396 = vmatpush2.bf16.msra.mxu0 %v341
    %397 = vmatprep.mubr.bf16.mxu0 %v261
    %398 = vmatmul.mubr.bf16.gmra.mxu0 %v245
    %v399 = vpop.f32.mrf.mxu0
    %v400 = vadd.f32 0.0, %v399
    %v401 = vpop.f32.mrf.mxu0
    %v402 = vpop.f32.mrf.mxu0
    %v403 = vadd.f32 0.0, %v402
    %v404 = vpop.f32.mrf.mxu0
    %405 = vmatprep.mubr.bf16.mxu0 %v262
    %406 = vmatmul.mubr.bf16.gmra.mxu0 %v246
    %v407 = vpop.f32.mrf.mxu0
    %v408 = vadd.f32 0.0, %v407
    %v409 = vpop.f32.mrf.mxu0
    %v410 = vpop.f32.mrf.mxu0
    %v411 = vadd.f32 0.0, %v410
    %v412 = vpop.f32.mrf.mxu0
    %413 = vmatprep.mubr.bf16.mxu0 %v263
    %414 = vmatmul.mubr.bf16.gmra.mxu0 %v247
    %v415 = vpop.f32.mrf.mxu0
    %v416 = vadd.f32 0.0, %v415
    %v417 = vpop.f32.mrf.mxu0
    %v418 = vpop.f32.mrf.mxu0
    %v419 = vadd.f32 0.0, %v418
    %v420 = vpop.f32.mrf.mxu0
    %421 = vmatprep.mubr.bf16.mxu0 %v264
    %422 = vmatmul.mubr.bf16.gmra.mxu0 %v248
    %v423 = vpop.f32.mrf.mxu0
    %v424 = vadd.f32 0.0, %v423
    %v425 = vpop.f32.mrf.mxu0
    %v426 = vpop.f32.mrf.mxu0
    %v427 = vadd.f32 0.0, %v426
    %v428 = vpop.f32.mrf.mxu0
    %429 = vmatprep.mubr.bf16.mxu0 %v265
    %430 = vmatmul.mubr.bf16.gmra.mxu0 %v249
    %v431 = vpop.f32.mrf.mxu0
    %v432 = vadd.f32 0.0, %v431
    %v433 = vpop.f32.mrf.mxu0
    %v434 = vpop.f32.mrf.mxu0
    %v435 = vadd.f32 0.0, %v434
    %v436 = vpop.f32.mrf.mxu0
    %437 = vmatprep.mubr.bf16.mxu0 %v266
    %438 = vmatmul.mubr.bf16.gmra.mxu0 %v250
    %v439 = vpop.f32.mrf.mxu0
    %v440 = vadd.f32 0.0, %v439
    %v441 = vpop.f32.mrf.mxu0
    %v442 = vpop.f32.mrf.mxu0
    %v443 = vadd.f32 0.0, %v442
    %v444 = vpop.f32.mrf.mxu0
    %445 = vmatprep.mubr.bf16.mxu0 %v267
    %446 = vmatmul.mubr.bf16.gmra.mxu0 %v251
    %v447 = vpop.f32.mrf.mxu0
    %v448 = vadd.f32 0.0, %v447
    %v449 = vpop.f32.mrf.mxu0
    %v450 = vpop.f32.mrf.mxu0
    %v451 = vadd.f32 0.0, %v450
    %v452 = vpop.f32.mrf.mxu0
    %453 = vmatprep.mubr.bf16.mxu0 %v268
    %454 = vmatmul.mubr.bf16.gmra.mxu0 %v252
    %v455 = vpop.f32.mrf.mxu0
    %v456 = vadd.f32 0.0, %v455
    %v457 = vpop.f32.mrf.mxu0
    %v458 = vpop.f32.mrf.mxu0
    %v459 = vadd.f32 0.0, %v458
    %v460 = vpop.f32.mrf.mxu0
    %461 = vdwg.mxu0
    %v462 = vadd.f32 %v61, %v400
    %v463 = vadd.f32 %v62, %v403
    %v464 = vadd.f32 %v63, %v408
    %v465 = vadd.f32 %v64, %v411
    %v466 = vadd.f32 %v65, %v416
    %v467 = vadd.f32 %v66, %v419
    %v468 = vadd.f32 %v67, %v424
    %v469 = vadd.f32 %v68, %v427
    %v470 = vadd.f32 %v69, %v432
    %v471 = vadd.f32 %v70, %v435
    %v472 = vadd.f32 %v71, %v440
    %v473 = vadd.f32 %v72, %v443
    %v474 = vadd.f32 %v73, %v448
    %v475 = vadd.f32 %v74, %v451
    %v476 = vadd.f32 %v75, %v456
    %v477 = vadd.f32 %v76, %v459
    %478 = vst [vmem:[#allocation2] sm:$0xff] %v462
    %479 = vst [vmem:[#allocation2 + $0x8] sm:$0xff] %v463
    %480 = vst [vmem:[#allocation2 + $0x10] sm:$0xff] %v464
    %481 = vst [vmem:[#allocation2 + $0x18] sm:$0xff] %v465
    %482 = vst [vmem:[#allocation2 + $0x20] sm:$0xff] %v466
    %483 = vst [vmem:[#allocation2 + $0x28] sm:$0xff] %v467
    %484 = vst [vmem:[#allocation2 + $0x30] sm:$0xff] %v468
    %485 = vst [vmem:[#allocation2 + $0x38] sm:$0xff] %v469
    %486 = vst [vmem:[#allocation2 + $0x40] sm:$0xff] %v470
    %487 = vst [vmem:[#allocation2 + $0x48] sm:$0xff] %v471
    %488 = vst [vmem:[#allocation2 + $0x50] sm:$0xff] %v472
    %489 = vst [vmem:[#allocation2 + $0x58] sm:$0xff] %v473
    %490 = vst [vmem:[#allocation2 + $0x60] sm:$0xff] %v474
    %491 = vst [vmem:[#allocation2 + $0x68] sm:$0xff] %v475
    %492 = vst [vmem:[#allocation2 + $0x70] sm:$0xff] %v476
    %493 = vst [vmem:[#allocation2 + $0x78] sm:$0xff] %v477
    // Predicated region
    $region22: #{tpu_custom_call.1} parent=1 // pred_check
      %p494 = pneg %p41
    $region23: #{tpu_custom_call.1} parent=1 // pred_check_branch
      %496 = sbr.rel (%p494) target = $region25
    $region24: #{tpu_custom_call.1} parent=1 // pred_region
      %v497 = vld [vmem:[#allocation2] sm:$0xff]
      %v498 = vld [vmem:[#allocation2 + $0x8] sm:$0xff]
      %v499 = vld [vmem:[#allocation2 + $0x10] sm:$0xff]
      %v500 = vld [vmem:[#allocation2 + $0x18] sm:$0xff]
      %v501 = vld [vmem:[#allocation2 + $0x20] sm:$0xff]
      %v502 = vld [vmem:[#allocation2 + $0x28] sm:$0xff]
      %v503 = vld [vmem:[#allocation2 + $0x30] sm:$0xff]
      %v504 = vld [vmem:[#allocation2 + $0x38] sm:$0xff]
      %v505 = vld [vmem:[#allocation2 + $0x40] sm:$0xff]
      %v506 = vld [vmem:[#allocation2 + $0x48] sm:$0xff]
      %v507 = vld [vmem:[#allocation2 + $0x50] sm:$0xff]
      %v508 = vld [vmem:[#allocation2 + $0x58] sm:$0xff]
      %v509 = vld [vmem:[#allocation2 + $0x60] sm:$0xff]
      %v510 = vld [vmem:[#allocation2 + $0x68] sm:$0xff]
      %v511 = vld [vmem:[#allocation2 + $0x70] sm:$0xff]
      %v512 = vld [vmem:[#allocation2 + $0x78] sm:$0xff]
      %513 = vst [vmem:[#allocation8] sm:$0xff] %v497
      %514 = vst [vmem:[#allocation8 + $0x8] sm:$0xff] %v498
      %515 = vst [vmem:[#allocation8 + $0x10] sm:$0xff] %v499
      %516 = vst [vmem:[#allocation8 + $0x18] sm:$0xff] %v500
      %517 = vst [vmem:[#allocation8 + $0x20] sm:$0xff] %v501
      %518 = vst [vmem:[#allocation8 + $0x28] sm:$0xff] %v502
      %519 = vst [vmem:[#allocation8 + $0x30] sm:$0xff] %v503
      %520 = vst [vmem:[#allocation8 + $0x38] sm:$0xff] %v504
      %521 = vst [vmem:[#allocation8 + $0x40] sm:$0xff] %v505
      %522 = vst [vmem:[#allocation8 + $0x48] sm:$0xff] %v506
      %523 = vst [vmem:[#allocation8 + $0x50] sm:$0xff] %v507
      %524 = vst [vmem:[#allocation8 + $0x58] sm:$0xff] %v508
      %525 = vst [vmem:[#allocation8 + $0x60] sm:$0xff] %v509
      %526 = vst [vmem:[#allocation8 + $0x68] sm:$0xff] %v510
      %527 = vst [vmem:[#allocation8 + $0x70] sm:$0xff] %v511
      %528 = vst [vmem:[#allocation8 + $0x78] sm:$0xff] %v512
    $region25: #{tpu_custom_call.1} parent=1 // pred_fallthru
      _
    // Predicated region
    $region26: #{tpu_custom_call.1} parent=1 // pred_check
      _
    $region27: #{tpu_custom_call.1} parent=1 // pred_check_branch
      %530 = sbr.rel (0) target = $region29
    $region28: #{tpu_custom_call.1} parent=1 // pred_region
      %s532 = ssub.s32 2048, 2048
      %533 = vsyncadd [#allocation5], %s532
      %s534 = sshll.u32 [#allocation8], 4
      %s535 = int_to_ptr.vmem [resolvable:$true] %s534
      %540 = dma.vmem_to_hbm [thread:$0]  %s535, 2048, %s2, [#allocation5], 128, 128, 8
    $region29: #{tpu_custom_call.1} parent=1 // pred_fallthru
      _
    // Predicated region
    $region30: #{tpu_custom_call.1} parent=1 // pred_check
      _
    $region31: #{tpu_custom_call.1} parent=1 // pred_check_branch
      %542 = sbr.rel (0) target = $region33
    $region32: #{tpu_custom_call.1} parent=1 // pred_region
      %543 = dma.done [#allocation5], 2048
    $region33: #{tpu_custom_call.1} parent=1 // pred_fallthru
      _
    %544 = vsyncpa [#allocation4], 1
    %545 = vsyncpa [#allocation7], 1
    %546 = vsyncpa [#allocation5], 1

</llo_original>
